<compile_context>
chip_gen: v7x
topology: tpu7x:2x2x1
jax: 0.10.0
libtpu: 0.0.40
codegen_flags: <defaults>
</compile_context>

<pallas_src>
import jax
import jax.numpy as jnp
from jax.experimental import pallas as pl
from jax.experimental.pallas import tpu as pltpu

_TARGET_BLOCK_BYTES = 8 * 1024 * 1024   # ~8 MiB main-operand blocks (v6e/v7x sweet spot; harmless on v5e)
_MIN_TARGET_BYTES = 1 * 1024 * 1024     # don't chop tiny inputs just to lengthen the grid
_VMEM_BUDGET_BYTES = 36 * 1024 * 1024   # budget for the double-buffered working set
_VMEM_LIMIT_BYTES = 40 * 1024 * 1024    # scoped VMEM limit (< v7x's 64 MiB physical VMEM)


def _norm_kernel(scale_ref, bias_ref, x_ref, o_ref):
    # x_ref/o_ref: (tile_r, tile_l) tile; scale_ref/bias_ref: (tile_r, 1) f32, broadcast over lanes.
    # Pure VPU fused multiply-add; compute in f32 and cast once on the way out.
    o_ref[...] = (x_ref[...] * scale_ref[...] + bias_ref[...]).astype(o_ref.dtype)


def _round_down(x, m):
    return (x // m) * m


def _choose_tiles(R, L, itemsize):
    """Pick (tile_r, tile_l) satisfying the (8, 128) BlockSpec rule for any (R, L)."""
    r_unit = min(R, 8)
    l_unit = min(L, 128)

    total_bytes = R * L * itemsize
    min_block_bytes = r_unit * l_unit * itemsize
    # Cap mid-sized inputs at ~total/4 so the grid has >= ~4 steps (keeps both v7x
    # TensorCores fed); never go below the minimal legal tile or ~1 MiB.
    target = max(min_block_bytes,
                 min(_TARGET_BLOCK_BYTES, max(_MIN_TARGET_BYTES, total_bytes // 4)))

    # Lane tiling: take the full H*W row if an 8-row stripe fits the target,
    # otherwise tile lanes in multiples of 128 (Pallas masks the partial tail).
    if L <= 128 or r_unit * L * itemsize <= target:
        tile_l = L
    else:
        tile_l = max(128, _round_down(target // (r_unit * itemsize), 128))

    # Row tiling: fill the target, but keep the double-buffered working set
    # (x + out + lane-padded per-row scale/bias) inside the VMEM budget.
    if R <= 8:
        tile_r = R
    else:
        bytes_per_row = 2 * tile_l * itemsize + 1024  # x + out + scale + bias (each row pads to >=512 B)
        rows_by_vmem = _VMEM_BUDGET_BYTES // (2 * bytes_per_row)
        rows_by_target = max(1, target // (tile_l * itemsize))
        rows = max(8, _round_down(min(rows_by_vmem, rows_by_target), 8))
        tile_r = R if rows >= R else rows
    return tile_r, tile_l


def layer_normalization(img, mean, std):
    """Pallas equivalent of LayerNormalization.forward for NCHW images."""
    N, C, H, W = img.shape
    R, L = N * C, H * W
    dtype = img.dtype
    itemsize = jnp.dtype(dtype).itemsize

    # Fold the divide into a fused multiply-add: y = x * (1/std) + (-mean/std).
    # Keep the folded stats in f32 so low-precision (e.g. bf16) inputs don't lose extra
    # accuracy versus the reference subtract/divide; the kernel casts once on output.
    std_f32 = std.astype(jnp.float32)
    mean_f32 = mean.astype(jnp.float32)
    scale_c = 1.0 / std_f32
    bias_c = -mean_f32 / std_f32
    scale_r = jnp.tile(scale_c, N).reshape(R, 1)   # one row per (n, c) plane
    bias_r = jnp.tile(bias_c, N).reshape(R, 1)

    # Lane-dense 2D view: last dim = H*W (contiguous in NCHW -> free reshape).
    x2d = img.reshape(R, L)

    tile_r, tile_l = _choose_tiles(R, L, itemsize)
    # Lane axis innermost: scale/bias blocks are re-DMA'd only when the row block changes.
    grid = (pl.cdiv(R, tile_r), pl.cdiv(L, tile_l))

    out2d = pl.pallas_call(
        _norm_kernel,
        out_shape=jax.ShapeDtypeStruct((R, L), dtype),
        grid=grid,
        in_specs=[
            pl.BlockSpec((tile_r, 1), lambda i, j: (i, 0)),
            pl.BlockSpec((tile_r, 1), lambda i, j: (i, 0)),
            pl.BlockSpec((tile_r, tile_l), lambda i, j: (i, j)),
        ],
        out_specs=pl.BlockSpec((tile_r, tile_l), lambda i, j: (i, j)),
        compiler_params=pltpu.CompilerParams(
            # Every tile is independent -> shardable across v7x's 2 TensorCores; no-op on v5e/v6e.
            dimension_semantics=("parallel", "parallel"),
            # Explicit: above v5e's 16 MiB default scoped limit, below v7x's 64 MiB physical VMEM.
            vmem_limit_bytes=_VMEM_LIMIT_BYTES,
        ),
    )(scale_r, bias_r, x2d)

    return out2d.reshape(N, C, H, W)


if __name__ == "__main__":
    key = jax.random.PRNGKey(0)
    k_img, k_img2 = jax.random.split(key)

    # Primary case matching the module: small NCHW batch with per-channel dataset stats.
    N, C, H, W = 2, 4, 16, 16
    img = jax.random.normal(k_img, (N, C, H, W), dtype=jnp.float32)
    mean = jnp.array([0.485, 0.456, 0.406, 0.5], dtype=jnp.float32)
    std = jnp.array([0.229, 0.224, 0.225, 0.25], dtype=jnp.float32)

    out = jax.block_until_ready(layer_normalization(img, mean, std))
    ref = (img - mean[:, None, None]) / std[:, None, None]
    assert out.shape == img.shape and out.dtype == img.dtype
    assert jnp.allclose(out, ref, atol=1e-5, rtol=1e-5)

    # Awkward-shape robustness check (N*C not a multiple of 8, H*W < 128) — exercises
    # the cdiv / full-dim tiling paths instead of the old divisor-only heuristic.
    N2, C2, H2, W2 = 3, 7, 9, 9
    img2 = jax.random.normal(k_img2, (N2, C2, H2, W2), dtype=jnp.float32)
    mean2 = jnp.linspace(0.1, 0.7, C2, dtype=jnp.float32)
    std2 = jnp.linspace(0.2, 0.9, C2, dtype=jnp.float32)
    out2 = jax.block_until_ready(layer_normalization(img2, mean2, std2))
    ref2 = (img2 - mean2[:, None, None]) / std2[:, None, None]
    assert jnp.allclose(out2, ref2, atol=1e-5, rtol=1e-5)

    print("KERNEL_OK")
</pallas_src>

<mosaic_0001>
module attributes {stable_mosaic.version = 11 : i64} {
  func.func @_norm_kernel(%arg0: i32, %arg1: i32, %arg2: memref<8x1xf32, #tpu.memory_space<vmem>>, %arg3: memref<8x1xf32, #tpu.memory_space<vmem>>, %arg4: memref<8x256xf32, #tpu.memory_space<vmem>>, %arg5: memref<8x256xf32, #tpu.memory_space<vmem>>) attributes {dimension_semantics = [#tpu.dimension_semantics<parallel>, #tpu.dimension_semantics<parallel>], iteration_bounds = array<i64: 1, 1>, scalar_prefetch = 0 : i64, scratch_operands = 0 : i64, tpu.core_type = #tpu.core_type<tc>, window_params = [{transform_indices = @transform_0, window_bounds = array<i64: 8, 1>}, {transform_indices = @transform_1, window_bounds = array<i64: 8, 1>}, {transform_indices = @transform_2, window_bounds = array<i64: 8, 256>}, {transform_indices = @transform_3, window_bounds = array<i64: 8, 256>}]} {
    %c0 = arith.constant 0 : index
    %c0_0 = arith.constant 0 : index
    %0 = vector.load %arg4[%c0, %c0_0] : memref<8x256xf32, #tpu.memory_space<vmem>>, vector<8x256xf32>
    %c0_1 = arith.constant 0 : index
    %c0_2 = arith.constant 0 : index
    %1 = vector.load %arg2[%c0_1, %c0_2] : memref<8x1xf32, #tpu.memory_space<vmem>>, vector<8x1xf32>
    %2 = vector.broadcast %1 : vector<8x1xf32> to vector<8x256xf32>
    %3 = arith.mulf %0, %2 : vector<8x256xf32>
    %c0_3 = arith.constant 0 : index
    %c0_4 = arith.constant 0 : index
    %4 = vector.load %arg3[%c0_3, %c0_4] : memref<8x1xf32, #tpu.memory_space<vmem>>, vector<8x1xf32>
    %5 = vector.broadcast %4 : vector<8x1xf32> to vector<8x256xf32>
    %6 = arith.addf %3, %5 : vector<8x256xf32>
    %c0_5 = arith.constant 0 : index
    %c0_6 = arith.constant 0 : index
    %7 = vector.load %arg5[%c0_5, %c0_6] : memref<8x256xf32, #tpu.memory_space<vmem>>, vector<8x256xf32>
    tpu.vector_store %arg5[%c0_5, %c0_6], %6 {strides = array<i32>} : memref<8x256xf32, #tpu.memory_space<vmem>>, vector<8x256xf32>,
    return
  }
  func.func @transform_0(%arg0: i32, %arg1: i32) -> (i32, i32) {
    %c0_i32 = arith.constant 0 : i32
    %c0_i32_0 = arith.constant 0 : i32
    return %arg0, %c0_i32 : i32, i32
  }
  func.func @transform_1(%arg0: i32, %arg1: i32) -> (i32, i32) {
    %c0_i32 = arith.constant 0 : i32
    %c0_i32_0 = arith.constant 0 : i32
    return %arg0, %c0_i32 : i32, i32
  }
  func.func @transform_2(%arg0: i32, %arg1: i32) -> (i32, i32) {
    %c0_i32 = arith.constant 0 : i32
    return %arg0, %arg1 : i32, i32
  }
  func.func @transform_3(%arg0: i32, %arg1: i32) -> (i32, i32) {
    %c0_i32 = arith.constant 0 : i32
    return %arg0, %arg1 : i32, i32
  }
}

</mosaic_0001>

<llo_original>
// kernel: tpu_custom_call.1
$region0: #{tpu_custom_call.1}
  #allocation0 [shape = 'u32[]', space=smem, size = 0x4, offset = 0x4, fixed_abs, tag = 'smem constant byte address 0x4 - core index']
  #allocation1 [shape = 'u32[144,128]{1,0:T(1,128)}', space=vmem, size = 0x12000, scoped, tag = 'internal scratch']
  %s0 = inlined_call_operand.vmem [shape: f32[8,1], index: 0, kind: input, shape index: {}]
  %s1 = inlined_call_operand.vmem [shape: f32[8,1], index: 1, kind: input, shape index: {}]
  %s2 = inlined_call_operand.vmem [shape: f32[8,256], index: 2, kind: input, shape index: {}]
  %s3 = inlined_call_operand.hbm [shape: f32[8,256], index: 3, kind: output, shape index: {}]
  %s4 = sld [smem:[#allocation0]]
  $region22: #{tpu_custom_call.1} parent=0
    _
  %s6 = ssub.s32 1, %s4
  %s7 = scalar_select 0, %s6, %s4
  $region1: #{tpu_custom_call.1} parent=0
    #allocation2 [shape = 'u8[8192]{0}', space=vmem, size = 0x2000, scoped, tag = 'output window, operand 0, single buffered']
    #allocation3 [shape = 's32[1]{0}', space=sflag, size = 0x4, scoped, tag = 'scoped memory for tpu_custom_call.1']
    %8 = vsyncpa [#allocation3], 0
    // Predicated region
    $region2: #{tpu_custom_call.1} parent=1 // pred_check
      _
    $region3: #{tpu_custom_call.1} parent=1 // pred_check_branch
      %10 = sbr.rel (0) target = $region5
    $region4: #{tpu_custom_call.1} parent=1 // pred_region
      _
    $region5: #{tpu_custom_call.1} parent=1 // pred_fallthru
      _
    // Predicated region
    $region6: #{tpu_custom_call.1} parent=1 // pred_check
      _
    $region7: #{tpu_custom_call.1} parent=1 // pred_check_branch
      %12 = sbr.rel (0) target = $region9
    $region8: #{tpu_custom_call.1} parent=1 // pred_region
      _
    $region9: #{tpu_custom_call.1} parent=1 // pred_fallthru
      _
    // Predicated region
    $region10: #{tpu_custom_call.1} parent=1 // pred_check
      _
    $region11: #{tpu_custom_call.1} parent=1 // pred_check_branch
      %14 = sbr.rel (0) target = $region13
    $region12: #{tpu_custom_call.1} parent=1 // pred_region
      _
    $region13: #{tpu_custom_call.1} parent=1 // pred_fallthru
      _
    %v15 = vld [vmem:[%s2] sm:$0xff]
    %v16 = vld [vmem:[%s2 + $0x8] sm:$0xff]
    %v17 = vld [vmem:[%s0] sm:$0xff]
    %19 = vset.pattern.permute.xlu0 0
    %20 = vperm.xlu0 %19, %v17
    %v21 = vpop.permute.xlu0 %20
    %v23 = vmul.f32 %v15, %v21
    %v24 = vmul.f32 %v16, %v21
    %v25 = vld [vmem:[%s1] sm:$0xff]
    %27 = vset.pattern.permute.xlu0 0
    %28 = vperm.xlu0 %27, %v25
    %v29 = vpop.permute.xlu0 %28
    %v31 = vadd.f32 %v23, %v29
    %v32 = vadd.f32 %v24, %v29
    %33 = vst [vmem:[#allocation2] sm:$0xff] %v31
    %34 = vst [vmem:[#allocation2 + $0x8] sm:$0xff] %v32
    // Predicated region
    $region14: #{tpu_custom_call.1} parent=1 // pred_check
      _
    $region15: #{tpu_custom_call.1} parent=1 // pred_check_branch
      %36 = sbr.rel (0) target = $region17
    $region16: #{tpu_custom_call.1} parent=1 // pred_region
      %s38 = ssub.s32 256, 256
      %39 = vsyncadd [#allocation3], %s38
      %s41 = sshll.u32 [#allocation2], 4
      %s42 = int_to_ptr.vmem [resolvable:$true] %s41
      %44 = dma.vmem_to_hbm [thread:$0]  %s42, 256, %s3, [#allocation3]
    $region17: #{tpu_custom_call.1} parent=1 // pred_fallthru
      _
    // Predicated region
    $region18: #{tpu_custom_call.1} parent=1 // pred_check
      _
    $region19: #{tpu_custom_call.1} parent=1 // pred_check_branch
      %46 = sbr.rel (0) target = $region21
    $region20: #{tpu_custom_call.1} parent=1 // pred_region
      %47 = dma.done [#allocation3], 256
    $region21: #{tpu_custom_call.1} parent=1 // pred_fallthru
      _
    %48 = vsyncpa [#allocation3], 1

</llo_original>
